<compile_context>
chip_gen: v5e
topology: v5e:2x2
jax: 0.10.0
libtpu: 0.0.40
codegen_flags: <defaults>
</compile_context>

<pallas_src>
import functools

import jax
import jax.numpy as jnp
from jax.experimental import pallas as pl
from jax.experimental.pallas import tpu as pltpu


# ----------------------------------------------------------------------------
# Kernel
# ----------------------------------------------------------------------------
def _global_graph_kernel(lk_valid, tk,
                         q_ref, x_ref, wq_ref, wkv_ref, o_ref,
                         qp_sc, m_sc, l_sc, acc_sc):
    # q_ref:   (Bblk, Lq_pad, Fin)   f32
    # x_ref:   (Bblk, Tk, Fin)       f32 (current key tile)
    # wq_ref:  (Fin, Fout)           bf16, pre-transposed, 1/sqrt(Fout) folded in
    # wkv_ref: (Fin, 2*Fout)         bf16, pre-transposed, [W_K | W_V] fused
    # o_ref:   (Bblk, Lq_pad, Fout)
    # qp_sc:   (Bblk, Lq_pad, Fout)  bf16  cached Q projection
    # m_sc/l_sc: (Bblk, Lq_pad, 1)   f32   online-softmax running max / sum
    # acc_sc:  (Bblk, Lq_pad, Fout)  f32   running P@V accumulator
    k_idx = pl.program_id(1)
    n_k = pl.num_programs(1)

    Bblk, Lq, Fin = q_ref.shape
    Fout = wq_ref.shape[1]

    @pl.when(k_idx == 0)
    def _init():
        # Project Q once per batch block (batch folded into the matmul M dim;
        # Lq is padded to a multiple of 8 so this reshape is layout-free).
        q2 = q_ref[...].reshape(Bblk * Lq, Fin).astype(jnp.bfloat16)
        qp = jnp.dot(q2, wq_ref[...], preferred_element_type=jnp.float32)
        qp_sc[...] = qp.astype(jnp.bfloat16).reshape(Bblk, Lq, Fout)
        m_sc[...] = jnp.full(m_sc.shape, -jnp.inf, dtype=m_sc.dtype)
        l_sc[...] = jnp.zeros(l_sc.shape, dtype=l_sc.dtype)
        acc_sc[...] = jnp.zeros(acc_sc.shape, dtype=acc_sc.dtype)

    # K/V projection for this key tile: one fused (Bblk*Tk, Fin) x (Fin, 2*Fout)
    # matmul, then cast to bf16 so the score / PV matmuls run on bf16 inputs.
    x2 = x_ref[...].reshape(Bblk * tk, Fin).astype(jnp.bfloat16)
    kv = jnp.dot(x2, wkv_ref[...], preferred_element_type=jnp.float32)
    kv3 = kv.astype(jnp.bfloat16).reshape(Bblk, tk, 2 * Fout)
    k3 = kv3[:, :, :Fout]
    v3 = kv3[:, :, Fout:]

    # Scores: contraction over the feature axis (no in-kernel K transpose);
    # the 1/sqrt(Fout) scale is already folded into W_Q.
    s = jnp.einsum("bqf,bkf->bqk", qp_sc[...], k3,
                   preferred_element_type=jnp.float32)        # (Bblk, Lq, Tk) f32

    if lk_valid % tk:  # static: key axis was padded -> mask padded keys to -inf
        key_ids = k_idx * tk + jax.lax.broadcasted_iota(jnp.int32, (1, 1, tk), 2)
        s = jnp.where(key_ids < lk_valid, s, -jnp.inf)

    # Online softmax update (f32 math; normalization deferred to finalize).
    m_prev = m_sc[...]
    m_new = jnp.maximum(m_prev, jnp.max(s, axis=-1, keepdims=True))
    alpha = jnp.exp(m_prev - m_new)
    p = jnp.exp(s - m_new)
    l_sc[...] = alpha * l_sc[...] + jnp.sum(p, axis=-1, keepdims=True)
    acc_sc[...] = alpha * acc_sc[...] + jnp.einsum(
        "bqk,bkf->bqf", p.astype(jnp.bfloat16), v3,
        preferred_element_type=jnp.float32)
    m_sc[...] = m_new

    @pl.when(k_idx == n_k - 1)
    def _finalize():
        # Deferred normalization on the small (Bblk, Lq, Fout) output; EUP
        # approx reciprocal instead of a VALU divide on the score matrix.
        inv_l = pl.reciprocal(l_sc[...], approx=True)
        o_ref[...] = (acc_sc[...] * inv_l).astype(o_ref.dtype)


# ----------------------------------------------------------------------------
# Tiling / VMEM budgeting helpers
# ----------------------------------------------------------------------------
def _round_up(x, m):
    return ((x + m - 1) // m) * m


def _cdiv(a, b):
    return (a + b - 1) // b


def _vmem_footprint_bytes(bblk, lq_pad, tk, fin, fout):
    """Rough per-step VMEM footprint (double-buffered I/O + scratch + temps)."""
    f32, bf16 = 4, 2
    inputs = 2 * f32 * bblk * (lq_pad + tk) * fin            # q & x tiles, 2x buffered
    weights = 2 * bf16 * (fin * fout + fin * 2 * fout)       # bf16 weights, 2x buffered
    outputs = 2 * f32 * bblk * lq_pad * fout                 # output tile, 2x buffered
    scratch = bblk * lq_pad * (bf16 * fout + f32 * fout) \
        + 2 * f32 * bblk * lq_pad * 128                      # qp/acc + (m,l lane-padded)
    transient = f32 * bblk * lq_pad * tk \
        + bf16 * bblk * tk * 2 * fout \
        + bf16 * bblk * (lq_pad + tk) * fin                  # scores + kv + bf16 copies
    return inputs + weights + outputs + scratch + int(1.5 * transient)


def _choose_tiling(B, lq_pad, lk, fin, fout, vmem_budget):
    # Key tile: bound the score intermediate; multiple of 8 sublanes.
    tk = min(_round_up(lk, 8), 512)
    # MXU occupancy: want Bblk*Lq_pad to reach the 256-row fill point
    # (v6e/v7x 256x256 MXU; v5e's 128 is a strict subset of this target).
    want = max(1, _cdiv(256, lq_pad))
    # Keep >= 2 batch grid steps so v7x's two TensorCores both get work and so
    # input-DMA/compute overlap exists (a 1-step grid cannot pipeline).
    cap = max(1, B // 2)
    bblk = min(B, want, cap)
    while B % bblk:
        bblk -= 1
    # Shrink Bblk, then Tk, until the per-step footprint fits the VMEM budget.
    while bblk > 1 and _vmem_footprint_bytes(bblk, lq_pad, tk, fin, fout) > vmem_budget:
        bblk -= 1
        while B % bblk:
            bblk -= 1
    while tk > 8 and _vmem_footprint_bytes(bblk, lq_pad, tk, fin, fout) > vmem_budget:
        tk = max(8, _round_up(tk // 2, 8))
    lk_pad = _round_up(lk, tk)
    return bblk, tk, lk_pad


# ----------------------------------------------------------------------------
# Wrappers
# ----------------------------------------------------------------------------
def prepare_global_graph_weights(w_q, w_k, w_v):
    """One-time weight prep (hoist out of the per-call path / jit it once).

    w_*: (Fout, Fin) PyTorch Linear layout -> pre-transposed (Fin, Fout) bf16,
    with the 1/sqrt(Fout) attention scale folded into W_Q and W_K/W_V fused.
    """
    fout = w_q.shape[0]
    scale = 1.0 / jnp.sqrt(jnp.float32(fout))
    wq_t = (w_q.T * scale).astype(jnp.bfloat16)                           # (Fin, Fout)
    wkv_t = jnp.concatenate([w_k.T, w_v.T], axis=1).astype(jnp.bfloat16)  # (Fin, 2*Fout)
    return wq_t, wkv_t


def global_graph_attention(query, x, wq_t, wkv_t, out_dtype=jnp.float32):
    """query: (B, Lq, Fin), x: (B, Lk, Fin), prepared weights -> (B, Lq, Fout)."""
    B, Lq, Fin = query.shape
    _, Lk, _ = x.shape
    Fout = wq_t.shape[1]

    # VMEM budget from the actual chip (conservative v7x fallback).
    try:
        vmem_cap = int(pltpu.get_tpu_info().vmem_capacity_bytes)
    except Exception:
        vmem_cap = 64 * 1024 * 1024
    vmem_budget = (vmem_cap * 3) // 4

    # Pad sequence dims to sublane multiples so in-kernel (B*L, F) reshapes are
    # layout-free (Lq = num_polylines-1 is usually not a multiple of 8).
    Lq_pad = _round_up(Lq, 8)
    Bblk, Tk, Lk_pad = _choose_tiling(B, Lq_pad, Lk, Fin, Fout, vmem_budget)

    q_in = query if Lq_pad == Lq else jnp.pad(query, ((0, 0), (0, Lq_pad - Lq), (0, 0)))
    x_in = x if Lk_pad == Lk else jnp.pad(x, ((0, 0), (0, Lk_pad - Lk), (0, 0)))

    grid = (B // Bblk, Lk_pad // Tk)

    # Scoped-VMEM limit: enough for this kernel (2x margin), never above budget.
    footprint = _vmem_footprint_bytes(Bblk, Lq_pad, Tk, Fin, Fout)
    vmem_limit = int(min(vmem_budget, max(32 * 1024 * 1024, 2 * footprint)))

    kernel = functools.partial(_global_graph_kernel, Lk, Tk)

    out = pl.pallas_call(
        kernel,
        out_shape=jax.ShapeDtypeStruct((B, Lq_pad, Fout), out_dtype),
        grid_spec=pltpu.PrefetchScalarGridSpec(
            num_scalar_prefetch=0,
            grid=grid,
            in_specs=[
                pl.BlockSpec((Bblk, Lq_pad, Fin), lambda b, k: (b, 0, 0)),
                pl.BlockSpec((Bblk, Tk, Fin), lambda b, k: (b, k, 0)),
                # Weights: constant index map; fetched once, revisited.
                # (pipeline_mode=pl.Buffered(1) would drop the redundant second
                # buffer; at 128-wide weights this is ~96 KiB so it is left at
                # the default for lowering portability and accounted for in the
                # VMEM budget above.)
                pl.BlockSpec((Fin, Fout), lambda b, k: (0, 0)),
                pl.BlockSpec((Fin, 2 * Fout), lambda b, k: (0, 0)),
            ],
            out_specs=pl.BlockSpec((Bblk, Lq_pad, Fout), lambda b, k: (b, 0, 0)),
            scratch_shapes=[
                pltpu.VMEM((Bblk, Lq_pad, Fout), jnp.bfloat16),   # cached Q proj
                pltpu.VMEM((Bblk, Lq_pad, 1), jnp.float32),       # running max
                pltpu.VMEM((Bblk, Lq_pad, 1), jnp.float32),       # running sum
                pltpu.VMEM((Bblk, Lq_pad, Fout), jnp.float32),    # running P@V acc
            ],
        ),
        compiler_params=pltpu.CompilerParams(
            dimension_semantics=("parallel", "arbitrary"),
            vmem_limit_bytes=vmem_limit,
        ),
    )(q_in, x_in, wq_t, wkv_t)

    return out if Lq_pad == Lq else out[:, :Lq, :]


def global_graph_layer(query, x, w_q, w_k, w_v):
    """Convenience entry: raw PyTorch-layout weights -> forward pass."""
    wq_t, wkv_t = prepare_global_graph_weights(w_q, w_k, w_v)
    return global_graph_attention(query, x, wq_t, wkv_t)


# ----------------------------------------------------------------------------
# Reference + self-test
# ----------------------------------------------------------------------------
def _reference(query, x, w_q, w_k, w_v):
    Q = jnp.einsum("bld,od->blo", query, w_q)
    K = jnp.einsum("bld,od->blo", x, w_k)
    V = jnp.einsum("bld,od->blo", x, w_v)
    d_out = w_q.shape[0]
    scores = jnp.einsum("bqo,bko->bqk", Q, K) / jnp.sqrt(jnp.float32(d_out))
    attn = jax.nn.softmax(scores, axis=2)
    return jnp.einsum("bqk,bko->bqo", attn, V)


if __name__ == "__main__":
    # Small shapes consistent with the module (features default 128).
    B = 2
    Lq = 8            # range(1 : num_polylines) — query subset
    Lk = 16           # num_polylines
    Fin = 128
    Fout = 128

    key = jax.random.PRNGKey(0)
    k1, k2, k3, k4, k5 = jax.random.split(key, 5)

    query = jax.random.normal(k1, (B, Lq, Fin), dtype=jnp.float32)
    x = jax.random.normal(k2, (B, Lk, Fin), dtype=jnp.float32)

    # Deterministic parameter init (PyTorch Linear weight layout: (out, in)).
    w_scale = 1.0 / jnp.sqrt(jnp.float32(Fin))
    w_q = jax.random.uniform(k3, (Fout, Fin), jnp.float32, -w_scale, w_scale)
    w_k = jax.random.uniform(k4, (Fout, Fin), jnp.float32, -w_scale, w_scale)
    w_v = jax.random.uniform(k5, (Fout, Fin), jnp.float32, -w_scale, w_scale)

    # One-time weight prep, hoisted out of the per-call path.
    wq_t, wkv_t = jax.block_until_ready(prepare_global_graph_weights(w_q, w_k, w_v))

    attn_fn = jax.jit(global_graph_attention)
    out = jax.block_until_ready(attn_fn(query, x, wq_t, wkv_t))

    ref = _reference(query, x, w_q, w_k, w_v)
    assert out.shape == (B, Lq, Fout), out.shape
    # bf16 MXU inputs (f32 accumulation) + approx reciprocal -> relaxed tolerance.
    max_err = float(jnp.max(jnp.abs(out - ref)))
    assert jnp.allclose(out, ref, atol=2e-2, rtol=2e-2), max_err

    print("KERNEL_OK")
</pallas_src>

<mosaic_0001>
module attributes {stable_mosaic.version = 11 : i64} {
  func.func @_global_graph_kernel(%arg0: i32, %arg1: i32, %arg2: memref<1x8x128xf32, #tpu.memory_space<vmem>>, %arg3: memref<1x16x128xf32, #tpu.memory_space<vmem>>, %arg4: memref<128x128xbf16, #tpu.memory_space<vmem>>, %arg5: memref<128x256xbf16, #tpu.memory_space<vmem>>, %arg6: memref<1x8x128xf32, #tpu.memory_space<vmem>>, %arg7: memref<1x8x128xbf16, #tpu.memory_space<vmem>>, %arg8: memref<1x8x1xf32, #tpu.memory_space<vmem>>, %arg9: memref<1x8x1xf32, #tpu.memory_space<vmem>>, %arg10: memref<1x8x128xf32, #tpu.memory_space<vmem>>) attributes {dimension_semantics = [#tpu.dimension_semantics<parallel>, #tpu.dimension_semantics<arbitrary>], iteration_bounds = array<i64: 2, 1>, scalar_prefetch = 0 : i64, scratch_operands = 4 : i64, tpu.core_type = #tpu.core_type<tc>, window_params = [{transform_indices = @transform_0, window_bounds = array<i64: 1, 8, 128>}, {transform_indices = @transform_1, window_bounds = array<i64: 1, 16, 128>}, {pipeline_mode = #tpu.pipeline_mode<synchronous>, transform_indices = @transform_2, window_bounds = array<i64: 128, 128>}, {pipeline_mode = #tpu.pipeline_mode<synchronous>, transform_indices = @transform_3, window_bounds = array<i64: 128, 256>}, {transform_indices = @transform_4, window_bounds = array<i64: 1, 8, 128>}]} {
    %c0_i32 = arith.constant 0 : i32
    %0 = arith.cmpi eq, %arg1, %c0_i32 : i32
    %1 = arith.extui %0 : i1 to i32
    %c0_i32_0 = arith.constant 0 : i32
    %2 = arith.cmpi ne, %1, %c0_i32_0 : i32
    scf.if %2 {
      %c0_32 = arith.constant 0 : index
      %c0_33 = arith.constant 0 : index
      %c0_34 = arith.constant 0 : index
      %40 = vector.load %arg2[%c0_32, %c0_33, %c0_34] : memref<1x8x128xf32, #tpu.memory_space<vmem>>, vector<1x8x128xf32>
      %41 = vector.shape_cast %40 : vector<1x8x128xf32> to vector<8x128xf32>
      %42 = arith.truncf %41 : vector<8x128xf32> to vector<8x128xbf16>
      %c0_35 = arith.constant 0 : index
      %c0_36 = arith.constant 0 : index
      %43 = vector.load %arg4[%c0_35, %c0_36] : memref<128x128xbf16, #tpu.memory_space<vmem>>, vector<128x128xbf16>
      %cst_37 = arith.constant dense<0.000000e+00> : vector<8x128xf32>
      %44 = tpu.matmul %42, %43, %cst_37 {dimension_numbers = #tpu.dot_dimension_numbers<[1], [0], [0], [1], [0, 0, 1, 1], [], []>} : vector<8x128xbf16>, vector<128x128xbf16>, vector<8x128xf32> -> vector<8x128xf32>
      %45 = arith.truncf %44 : vector<8x128xf32> to vector<8x128xbf16>
      %46 = vector.shape_cast %45 : vector<8x128xbf16> to vector<1x8x128xbf16>
      %c0_38 = arith.constant 0 : index
      %c0_39 = arith.constant 0 : index
      %c0_40 = arith.constant 0 : index
      %47 = vector.load %arg7[%c0_38, %c0_39, %c0_40] : memref<1x8x128xbf16, #tpu.memory_space<vmem>>, vector<1x8x128xbf16>
      tpu.vector_store %arg7[%c0_38, %c0_39, %c0_40], %46 {strides = array<i32>} : memref<1x8x128xbf16, #tpu.memory_space<vmem>>, vector<1x8x128xbf16>,
      %cst_41 = arith.constant 0xFF800000 : f32
      %48 = vector.broadcast %cst_41 : f32 to vector<1x8x1xf32>
      %c0_42 = arith.constant 0 : index
      %c0_43 = arith.constant 0 : index
      %c0_44 = arith.constant 0 : index
      %49 = vector.load %arg8[%c0_42, %c0_43, %c0_44] : memref<1x8x1xf32, #tpu.memory_space<vmem>>, vector<1x8x1xf32>
      tpu.vector_store %arg8[%c0_42, %c0_43, %c0_44], %48 {strides = array<i32>} : memref<1x8x1xf32, #tpu.memory_space<vmem>>, vector<1x8x1xf32>,
      %cst_45 = arith.constant 0.000000e+00 : f32
      %50 = vector.broadcast %cst_45 : f32 to vector<1x8x1xf32>
      %c0_46 = arith.constant 0 : index
      %c0_47 = arith.constant 0 : index
      %c0_48 = arith.constant 0 : index
      %51 = vector.load %arg9[%c0_46, %c0_47, %c0_48] : memref<1x8x1xf32, #tpu.memory_space<vmem>>, vector<1x8x1xf32>
      tpu.vector_store %arg9[%c0_46, %c0_47, %c0_48], %50 {strides = array<i32>} : memref<1x8x1xf32, #tpu.memory_space<vmem>>, vector<1x8x1xf32>,
      %cst_49 = arith.constant 0.000000e+00 : f32
      %52 = vector.broadcast %cst_49 : f32 to vector<1x8x128xf32>
      %c0_50 = arith.constant 0 : index
      %c0_51 = arith.constant 0 : index
      %c0_52 = arith.constant 0 : index
      %53 = vector.load %arg10[%c0_50, %c0_51, %c0_52] : memref<1x8x128xf32, #tpu.memory_space<vmem>>, vector<1x8x128xf32>
      tpu.vector_store %arg10[%c0_50, %c0_51, %c0_52], %52 {strides = array<i32>} : memref<1x8x128xf32, #tpu.memory_space<vmem>>, vector<1x8x128xf32>,
    } else {
    }
    %c0 = arith.constant 0 : index
    %c0_1 = arith.constant 0 : index
    %c0_2 = arith.constant 0 : index
    %3 = vector.load %arg3[%c0, %c0_1, %c0_2] : memref<1x16x128xf32, #tpu.memory_space<vmem>>, vector<1x16x128xf32>
    %4 = vector.shape_cast %3 : vector<1x16x128xf32> to vector<16x128xf32>
    %5 = arith.truncf %4 : vector<16x128xf32> to vector<16x128xbf16>
    %c0_3 = arith.constant 0 : index
    %c0_4 = arith.constant 0 : index
    %6 = vector.load %arg5[%c0_3, %c0_4] : memref<128x256xbf16, #tpu.memory_space<vmem>>, vector<128x256xbf16>
    %cst = arith.constant dense<0.000000e+00> : vector<16x256xf32>
    %7 = tpu.matmul %5, %6, %cst {dimension_numbers = #tpu.dot_dimension_numbers<[1], [0], [0], [1], [0, 0, 1, 1], [], []>} : vector<16x128xbf16>, vector<128x256xbf16>, vector<16x256xf32> -> vector<16x256xf32>
    %8 = arith.truncf %7 : vector<16x256xf32> to vector<16x256xbf16>
    %9 = vector.shape_cast %8 : vector<16x256xbf16> to vector<1x16x256xbf16>
    %10 = vector.extract_strided_slice %9 {offsets = [0, 0, 0], sizes = [1, 16, 128], strides = [1, 1, 1]} : vector<1x16x256xbf16> to vector<1x16x128xbf16>
    %11 = vector.extract_strided_slice %9 {offsets = [0, 0, 128], sizes = [1, 16, 128], strides = [1, 1, 1]} : vector<1x16x256xbf16> to vector<1x16x128xbf16>
    %c0_5 = arith.constant 0 : index
    %c0_6 = arith.constant 0 : index
    %c0_7 = arith.constant 0 : index
    %12 = vector.load %arg7[%c0_5, %c0_6, %c0_7] : memref<1x8x128xbf16, #tpu.memory_space<vmem>>, vector<1x8x128xbf16>
    "tpu.trace_start"() <{level = 10 : i32, message = "bqf,bkf->bqk"}> : () -> ()
    %cst_8 = arith.constant dense<0.000000e+00> : vector<1x8x16xf32>
    %13 = tpu.matmul %12, %10, %cst_8 {dimension_numbers = #tpu.dot_dimension_numbers<[2], [2], [1], [1], [0, 0, 0, 1, 1, 1], [0], [0]>} : vector<1x8x128xbf16>, vector<1x16x128xbf16>, vector<1x8x16xf32> -> vector<1x8x16xf32>
    "tpu.trace_stop"() : () -> ()
    %c0_9 = arith.constant 0 : index
    %c0_10 = arith.constant 0 : index
    %c0_11 = arith.constant 0 : index
    %14 = vector.load %arg8[%c0_9, %c0_10, %c0_11] : memref<1x8x1xf32, #tpu.memory_space<vmem>>, vector<1x8x1xf32>
    %cst_12 = arith.constant dense<0xFF800000> : vector<1x8xf32>
    %15 = vector.multi_reduction <maximumf>, %13, %cst_12 [2] : vector<1x8x16xf32> to vector<1x8xf32>
    %16 = vector.shape_cast %15 : vector<1x8xf32> to vector<1x8x1xf32>
    %17 = arith.maximumf %14, %16 : vector<1x8x1xf32>
    %18 = arith.subf %14, %17 : vector<1x8x1xf32>
    %19 = math.exp %18 : vector<1x8x1xf32>
    %20 = vector.broadcast %17 : vector<1x8x1xf32> to vector<1x8x16xf32>
    %21 = arith.subf %13, %20 : vector<1x8x16xf32>
    %22 = math.exp %21 : vector<1x8x16xf32>
    %c0_13 = arith.constant 0 : index
    %c0_14 = arith.constant 0 : index
    %c0_15 = arith.constant 0 : index
    %23 = vector.load %arg9[%c0_13, %c0_14, %c0_15] : memref<1x8x1xf32, #tpu.memory_space<vmem>>, vector<1x8x1xf32>
    %24 = arith.mulf %19, %23 : vector<1x8x1xf32>
    %cst_16 = arith.constant dense<0.000000e+00> : vector<1x8xf32>
    %25 = vector.multi_reduction <add>, %22, %cst_16 [2] : vector<1x8x16xf32> to vector<1x8xf32>
    %26 = vector.shape_cast %25 : vector<1x8xf32> to vector<1x8x1xf32>
    %27 = arith.addf %24, %26 : vector<1x8x1xf32>
    %c0_17 = arith.constant 0 : index
    %c0_18 = arith.constant 0 : index
    %c0_19 = arith.constant 0 : index
    %28 = vector.load %arg9[%c0_17, %c0_18, %c0_19] : memref<1x8x1xf32, #tpu.memory_space<vmem>>, vector<1x8x1xf32>
    tpu.vector_store %arg9[%c0_17, %c0_18, %c0_19], %27 {strides = array<i32>} : memref<1x8x1xf32, #tpu.memory_space<vmem>>, vector<1x8x1xf32>,
    %c0_20 = arith.constant 0 : index
    %c0_21 = arith.constant 0 : index
    %c0_22 = arith.constant 0 : index
    %29 = vector.load %arg10[%c0_20, %c0_21, %c0_22] : memref<1x8x128xf32, #tpu.memory_space<vmem>>, vector<1x8x128xf32>
    %30 = vector.broadcast %19 : vector<1x8x1xf32> to vector<1x8x128xf32>
    %31 = arith.mulf %30, %29 : vector<1x8x128xf32>
    %32 = arith.truncf %22 : vector<1x8x16xf32> to vector<1x8x16xbf16>
    "tpu.trace_start"() <{level = 10 : i32, message = "bqk,bkf->bqf"}> : () -> ()
    %cst_23 = arith.constant dense<0.000000e+00> : vector<1x8x128xf32>
    %33 = tpu.matmul %32, %11, %cst_23 {dimension_numbers = #tpu.dot_dimension_numbers<[2], [1], [1], [2], [0, 0, 0, 1, 1, 2], [0], [0]>} : vector<1x8x16xbf16>, vector<1x16x128xbf16>, vector<1x8x128xf32> -> vector<1x8x128xf32>
    "tpu.trace_stop"() : () -> ()
    %34 = arith.addf %31, %33 : vector<1x8x128xf32>
    %c0_24 = arith.constant 0 : index
    %c0_25 = arith.constant 0 : index
    %c0_26 = arith.constant 0 : index
    %35 = vector.load %arg10[%c0_24, %c0_25, %c0_26] : memref<1x8x128xf32, #tpu.memory_space<vmem>>, vector<1x8x128xf32>
    tpu.vector_store %arg10[%c0_24, %c0_25, %c0_26], %34 {strides = array<i32>} : memref<1x8x128xf32, #tpu.memory_space<vmem>>, vector<1x8x128xf32>,
    %c0_27 = arith.constant 0 : index
    %c0_28 = arith.constant 0 : index
    %c0_29 = arith.constant 0 : index
    %36 = vector.load %arg8[%c0_27, %c0_28, %c0_29] : memref<1x8x1xf32, #tpu.memory_space<vmem>>, vector<1x8x1xf32>
    tpu.vector_store %arg8[%c0_27, %c0_28, %c0_29], %17 {strides = array<i32>} : memref<1x8x1xf32, #tpu.memory_space<vmem>>, vector<1x8x1xf32>,
    %c0_i32_30 = arith.constant 0 : i32
    %37 = arith.cmpi eq, %arg1, %c0_i32_30 : i32
    %38 = arith.extui %37 : i1 to i32
    %c0_i32_31 = arith.constant 0 : i32
    %39 = arith.cmpi ne, %38, %c0_i32_31 : i32
    scf.if %39 {
      %c0_32 = arith.constant 0 : index
      %c0_33 = arith.constant 0 : index
      %c0_34 = arith.constant 0 : index
      %40 = vector.load %arg9[%c0_32, %c0_33, %c0_34] : memref<1x8x1xf32, #tpu.memory_space<vmem>>, vector<1x8x1xf32>
      %41 = tpu.reciprocal %40 {approx = true} : vector<1x8x1xf32> -> vector<1x8x1xf32>
      %c0_35 = arith.constant 0 : index
      %c0_36 = arith.constant 0 : index
      %c0_37 = arith.constant 0 : index
      %42 = vector.load %arg10[%c0_35, %c0_36, %c0_37] : memref<1x8x128xf32, #tpu.memory_space<vmem>>, vector<1x8x128xf32>
      %43 = vector.broadcast %41 : vector<1x8x1xf32> to vector<1x8x128xf32>
      %44 = arith.mulf %42, %43 : vector<1x8x128xf32>
      %c0_38 = arith.constant 0 : index
      %c0_39 = arith.constant 0 : index
      %c0_40 = arith.constant 0 : index
      %45 = vector.load %arg6[%c0_38, %c0_39, %c0_40] : memref<1x8x128xf32, #tpu.memory_space<vmem>>, vector<1x8x128xf32>
      tpu.vector_store %arg6[%c0_38, %c0_39, %c0_40], %44 {strides = array<i32>} : memref<1x8x128xf32, #tpu.memory_space<vmem>>, vector<1x8x128xf32>,
    } else {
    }
    return
  }
  func.func @transform_0(%arg0: i32, %arg1: i32) -> (i32, i32, i32) {
    %c0_i32 = arith.constant 0 : i32
    %c0_i32_0 = arith.constant 0 : i32
    %c0_i32_1 = arith.constant 0 : i32
    return %arg0, %c0_i32, %c0_i32_0 : i32, i32, i32
  }
  func.func @transform_1(%arg0: i32, %arg1: i32) -> (i32, i32, i32) {
    %c0_i32 = arith.constant 0 : i32
    %c0_i32_0 = arith.constant 0 : i32
    return %arg0, %arg1, %c0_i32 : i32, i32, i32
  }
  func.func @transform_2(%arg0: i32, %arg1: i32) -> (i32, i32) {
    %c0_i32 = arith.constant 0 : i32
    %c0_i32_0 = arith.constant 0 : i32
    %c0_i32_1 = arith.constant 0 : i32
    return %c0_i32, %c0_i32_0 : i32, i32
  }
  func.func @transform_3(%arg0: i32, %arg1: i32) -> (i32, i32) {
    %c0_i32 = arith.constant 0 : i32
    %c0_i32_0 = arith.constant 0 : i32
    %c0_i32_1 = arith.constant 0 : i32
    return %c0_i32, %c0_i32_0 : i32, i32
  }
  func.func @transform_4(%arg0: i32, %arg1: i32) -> (i32, i32, i32) {
    %c0_i32 = arith.constant 0 : i32
    %c0_i32_0 = arith.constant 0 : i32
    %c0_i32_1 = arith.constant 0 : i32
    return %arg0, %c0_i32, %c0_i32_0 : i32, i32, i32
  }
}

</mosaic_0001>

<llo_original>
// kernel: global_graph_attention.1
$region0: #{global_graph_attention.1}
  #allocation0 [shape = 'u32[]', space=smem, size = 0x4, offset = 0x4, fixed_abs, tag = 'smem constant byte address 0x4 - core index']
  #allocation1 [shape = 'u32[72,128]{1,0:T(1,128)}', space=vmem, size = 0x9000, scoped, tag = 'internal scratch']
  #allocation2 [shape = 'bf16[1,8,128]{2,1,0:T(8,128)(2,1)}', space=vmem, size = 0x800, scoped, tag = 'scratch operand']
  #allocation3 [shape = 'f32[1,8,1]{2,1,0:T(8,128)}', space=vmem, size = 0x1000, scoped, tag = 'scratch operand']
  #allocation4 [shape = 'f32[1,8,1]{2,1,0:T(8,128)}', space=vmem, size = 0x1000, scoped, tag = 'scratch operand']
  #allocation5 [shape = 'f32[1,8,128]{2,1,0:T(8,128)}', space=vmem, size = 0x1000, scoped, tag = 'scratch operand']
  %s0 = inlined_call_operand.hbm [shape: f32[2,8,128], index: 0, kind: input, shape index: {}]
  %s1 = inlined_call_operand.hbm [shape: f32[2,16,128], index: 1, kind: input, shape index: {}]
  %s2 = inlined_call_operand.hbm [shape: bf16[128,128], index: 2, kind: input, shape index: {}]
  %s3 = inlined_call_operand.hbm [shape: bf16[128,256], index: 3, kind: input, shape index: {}]
  %s4 = inlined_call_operand.hbm [shape: f32[2,8,128], index: 4, kind: output, shape index: {}]
  %s5 = sld [smem:[#allocation0]]
  $region73: #{global_graph_attention.1} parent=0
    _
  %s7 = ssub.s32 1, %s5
  %s8 = scalar_select 0, %s7, %s5
  $region1: #{global_graph_attention.1} parent=0
    #allocation6 [shape = 'u8[8192]{0}', space=vmem, size = 0x2000, scoped, tag = 'input window, operand 0']
    #allocation7 [shape = 's32[2]{0}', space=sflag, size = 0x8, scoped, tag = 'scoped memory for global_graph_attention.1']
    #allocation8 [shape = 's32[2]{0}', space=sflag, size = 0x8, scoped, tag = 'scoped memory for global_graph_attention.1']
    #allocation9 [shape = 'u8[16384]{0}', space=vmem, size = 0x4000, scoped, tag = 'input window, operand 1']
    #allocation10 [shape = 's32[2]{0}', space=sflag, size = 0x8, scoped, tag = 'scoped memory for global_graph_attention.1']
    #allocation11 [shape = 'u8[32768]{0}', space=vmem, size = 0x8000, scoped, tag = 'input window, operand 2, single buffered']
    #allocation12 [shape = 'u8[65536]{0}', space=vmem, size = 0x10000, scoped, tag = 'input window, operand 3, single buffered']
    #allocation13 [shape = 's32[1]{0}', space=sflag, size = 0x4, scoped, tag = 'scoped memory for global_graph_attention.1']
    #allocation14 [shape = 'u8[8192]{0}', space=vmem, size = 0x2000, scoped, tag = 'output window, operand 0']
    %9 = vsyncpa [#allocation7], 0
    %s10 = scalar_lea.sflag [#allocation7], 1
    %11 = vsyncpa %s10, 0
    %12 = vsyncpa [#allocation10], 0
    %s13 = scalar_lea.sflag [#allocation10], 1
    %14 = vsyncpa %s13, 0
    %15 = vsyncpa [#allocation13], 0
    %16 = vsyncpa [#allocation8], 0
    %s17 = scalar_lea.sflag [#allocation8], 1
    %18 = vsyncpa %s17, 0
    loop: start=0, step=1, limit=4
    $region2: #{global_graph_attention.1} parent=1 // loop_pre_header
      _
    $region3: #{global_graph_attention.1} parent=1 // loop_header
      %s20 = sphi 0, %s24
      %p21 = scmp.ge.s32.totalorder %s20, 4
      %s27 = sphi 0, %s39
      %s28 = sphi 0, %s35
      %s29 = sphi 0, %s27
      %s30 = sphi 0, %s28
      %s31 = sphi 0, %s29
      %s32 = sphi 0, %s30
      %s42 = sphi 0, %s44
      %s45 = sphi 0, %s42
      %s46 = sphi 0, %s45
      %s62 = sphi 0, %s46
      %s70 = sphi 0, %s72
      %s73 = sphi 0, %s70
      %s74 = sphi 0, %s73
      %s90 = sphi 0, %s74
      %s94 = sphi 0, %s94
      %s96 = sphi 0, %s94
      %s97 = sphi 0, %s96
      %s111 = sphi 0, %s97
      %s115 = sphi 0, %s115
      %s117 = sphi 0, %s115
      %s118 = sphi 0, %s117
      %s132 = sphi 0, %s118
      %s138 = sphi 0, %s140
      %s141 = sphi 0, %s138
      %s142 = sphi 0, %s141
      %s158 = sphi 0, %s142
    $region4: #{global_graph_attention.1} parent=1 // loop_header_branch
      %23 = sbr.rel (%p21) target = $region8
    $region5: #{global_graph_attention.1} parent=1 // loop_body
      %s25 = ssub.s32 %s20, 1
      %s26 = ssub.s32 %s20, 2
      %s33 = sadd.s32 1, %s28
      %p34 = scmp.ge.s32.totalorder %s33, 1
      %s35 = scalar_select %p34, 0, %s33
      %s36 = sadd.s32 1, %s27
      %s37 = scalar_select %p34, %s36, %s27
      %p38 = scmp.ge.s32.totalorder %s37, 2
      %s39 = scalar_select %p38, 0, %s37
      %s40 = ssub.s32 %s27, %s39
      %p41 = scmp.eq.s32.totalorder %s40, 0
      %s43 = sadd.s32 %s42, 1
      %s44 = scalar_select %p41, %s42, %s43
      %p47 = pneg %p41
      %p48 = scmp.eq.s32.totalorder %s20, 1
      %p49 = por %p47, %p48
      %p50 = scmp.ne.s32.totalorder %s42, %s45
      %p51 = scmp.eq.s32.totalorder %s20, 0
      %p52 = por %p50, %p51
      %p53 = scmp.ne.s32.totalorder %s42, %s45
      %p54 = scmp.eq.s32.totalorder %s25, 1
      %p55 = por %p53, %p54
      %p56 = scmp.ne.s32.totalorder %s45, %s46
      %p57 = scmp.eq.s32.totalorder %s25, 0
      %p58 = por %p56, %p57
      %p59 = scmp.ne.s32.totalorder %s45, %s46
      %p60 = scmp.eq.s32.totalorder %s26, 1
      %p61 = por %p59, %p60
      %p63 = scmp.ne.s32.totalorder %s46, %s62
      %p64 = scmp.eq.s32.totalorder %s26, 0
      %p65 = por %p63, %p64
      %s66 = ssub.s32 %s27, %s39
      %s67 = ssub.s32 %s28, %s35
      %s68 = sor.u32 %s66, %s67
      %p69 = scmp.eq.s32.totalorder %s68, 0
      %s71 = sadd.s32 %s70, 1
      %s72 = scalar_select %p69, %s70, %s71
      %p75 = pneg %p69
      %p76 = scmp.eq.s32.totalorder %s20, 1
      %p77 = por %p75, %p76
      %p78 = scmp.ne.s32.totalorder %s70, %s73
      %p79 = scmp.eq.s32.totalorder %s20, 0
      %p80 = por %p78, %p79
      %p81 = scmp.ne.s32.totalorder %s70, %s73
      %p82 = scmp.eq.s32.totalorder %s25, 1
      %p83 = por %p81, %p82
      %p84 = scmp.ne.s32.totalorder %s73, %s74
      %p85 = scmp.eq.s32.totalorder %s25, 0
      %p86 = por %p84, %p85
      %p87 = scmp.ne.s32.totalorder %s73, %s74
      %p88 = scmp.eq.s32.totalorder %s26, 1
      %p89 = por %p87, %p88
      %p91 = scmp.ne.s32.totalorder %s74, %s90
      %p92 = scmp.eq.s32.totalorder %s26, 0
      %p93 = por %p91, %p92
      %s95 = sadd.s32 %s94, 1
      %p98 = scmp.eq.s32.totalorder %s20, 1
      %p99 = scmp.ne.s32.totalorder %s94, %s96
      %p100 = scmp.eq.s32.totalorder %s20, 0
      %p101 = por %p99, %p100
      %p102 = scmp.ne.s32.totalorder %s94, %s96
      %p103 = scmp.eq.s32.totalorder %s25, 1
      %p104 = por %p102, %p103
      %p105 = scmp.ne.s32.totalorder %s96, %s97
      %p106 = scmp.eq.s32.totalorder %s25, 0
      %p107 = por %p105, %p106
      %p108 = scmp.ne.s32.totalorder %s96, %s97
      %p109 = scmp.eq.s32.totalorder %s26, 1
      %p110 = por %p108, %p109
      %p112 = scmp.ne.s32.totalorder %s97, %s111
      %p113 = scmp.eq.s32.totalorder %s26, 0
      %p114 = por %p112, %p113
      %s116 = sadd.s32 %s115, 1
      %p119 = scmp.eq.s32.totalorder %s20, 1
      %p120 = scmp.ne.s32.totalorder %s115, %s117
      %p121 = scmp.eq.s32.totalorder %s20, 0
      %p122 = por %p120, %p121
      %p123 = scmp.ne.s32.totalorder %s115, %s117
      %p124 = scmp.eq.s32.totalorder %s25, 1
      %p125 = por %p123, %p124
      %p126 = scmp.ne.s32.totalorder %s117, %s118
      %p127 = scmp.eq.s32.totalorder %s25, 0
      %p128 = por %p126, %p127
      %p129 = scmp.ne.s32.totalorder %s117, %s118
      %p130 = scmp.eq.s32.totalorder %s26, 1
      %p131 = por %p129, %p130
      %p133 = scmp.ne.s32.totalorder %s118, %s132
      %p134 = scmp.eq.s32.totalorder %s26, 0
      %p135 = por %p133, %p134
      %s136 = ssub.s32 %s27, %s39
      %p137 = scmp.eq.s32.totalorder %s136, 0
      %s139 = sadd.s32 %s138, 1
      %s140 = scalar_select %p137, %s138, %s139
      %p143 = pneg %p137
      %p144 = scmp.eq.s32.totalorder %s20, 1
      %p145 = por %p143, %p144
      %p146 = scmp.ne.s32.totalorder %s138, %s141
      %p147 = scmp.eq.s32.totalorder %s20, 0
      %p148 = por %p146, %p147
      %p149 = scmp.ne.s32.totalorder %s138, %s141
      %p150 = scmp.eq.s32.totalorder %s25, 1
      %p151 = por %p149, %p150
      %p152 = scmp.ne.s32.totalorder %s141, %s142
      %p153 = scmp.eq.s32.totalorder %s25, 0
      %p154 = por %p152, %p153
      %p155 = scmp.ne.s32.totalorder %s141, %s142
      %p156 = scmp.eq.s32.totalorder %s26, 1
      %p157 = por %p155, %p156
      %p159 = scmp.ne.s32.totalorder %s142, %s158
      %p160 = scmp.eq.s32.totalorder %s26, 0
      %p161 = por %p159, %p160
      %p162 = scmp.le.s32.totalorder 1, %s20
      %p163 = scmp.lt.s32.totalorder %s20, 3
      %p164 = pnand %p162, %p163
      %p165 = pneg %p164
      // Predicated region
      $region9: #{global_graph_attention.1} parent=5 // pred_check
        _
      $region10: #{global_graph_attention.1} parent=5 // pred_check_branch
        %167 = sbr.rel (%p164) target = $region12
      $region11: #{global_graph_attention.1} parent=5 // pred_region
        %s168 = ssub.s32 %s20, 1
        // Predicated region
        $region13: #{global_graph_attention.1} parent=11 // pred_check
          %p169 = pneg %p107
        $region14: #{global_graph_attention.1} parent=11 // pred_check_branch
          %171 = sbr.rel (%p169) target = $region16
        $region15: #{global_graph_attention.1} parent=11 // pred_region
          %173 = vsyncadd [#allocation10], 0
          %s174 = sshll.u32 %s2, 4
          %s175 = int_to_ptr.hbm [resolvable:$true] %s174
          %s176 = sshll.u32 [#allocation11], 4
          %s177 = int_to_ptr.vmem [resolvable:$true] %s176
          %182 = dma.hbm_to_vmem [thread:$0]  %s175, 1024, %s177, [#allocation10], 64, 64, 4
        $region16: #{global_graph_attention.1} parent=11 // pred_fallthru
          _
        // Predicated region
        $region17: #{global_graph_attention.1} parent=11 // pred_check
          %p183 = pneg %p128
        $region18: #{global_graph_attention.1} parent=11 // pred_check_branch
          %185 = sbr.rel (%p183) target = $region20
        $region19: #{global_graph_attention.1} parent=11 // pred_region
          %187 = vsyncadd [#allocation13], 0
          %s188 = sshll.u32 %s3, 4
          %s189 = int_to_ptr.hbm [resolvable:$true] %s188
          %s190 = sshll.u32 [#allocation12], 4
          %s191 = int_to_ptr.vmem [resolvable:$true] %s190
          %196 = dma.hbm_to_vmem [thread:$0]  %s189, 2048, %s191, [#allocation13], 128, 128, 8
        $region20: #{global_graph_attention.1} parent=11 // pred_fallthru
          _
      $region12: #{global_graph_attention.1} parent=5 // pred_fallthru
        _
      %p197 = scmp.lt.s32.totalorder %s20, 2
      // Predicated region
      $region21: #{global_graph_attention.1} parent=5 // pred_check
        %p198 = pneg %p197
      $region22: #{global_graph_attention.1} parent=5 // pred_check_branch
        %200 = sbr.rel (%p198) target = $region24
      $region23: #{global_graph_attention.1} parent=5 // pred_region
        // Predicated region
        $region25: #{global_graph_attention.1} parent=23 // pred_check
          %p201 = pneg %p52
        $region26: #{global_graph_attention.1} parent=23 // pred_check_branch
          %203 = sbr.rel (%p201) target = $region28
        $region27: #{global_graph_attention.1} parent=23 // pred_region
          %s204 = sand.u32 %s42, 1
          %s205 = scalar_lea.sflag [#allocation7], %s204
          %s206 = sand.u32 %s42, 1
          %s207 = smul.addr %s206, 8
          %s208 = scalar_lea.vmem [#allocation6], %s207
          %210 = vsyncadd %s205, 0
          %s211 = smul.addr %s27, 8
          %s212 = scalar_lea.hbm %s0, %s211
          %s214 = sshll.u32 %s212, 4
          %s215 = int_to_ptr.hbm [resolvable:$true] %s214
          %s216 = sshll.u32 %s208, 4
          %s217 = int_to_ptr.vmem [resolvable:$true] %s216
          %219 = dma.hbm_to_vmem [thread:$0]  %s215, 128, %s217, %s205
        $region28: #{global_graph_attention.1} parent=23 // pred_fallthru
          _
        // Predicated region
        $region29: #{global_graph_attention.1} parent=23 // pred_check
          %p220 = pneg %p80
        $region30: #{global_graph_attention.1} parent=23 // pred_check_branch
          %222 = sbr.rel (%p220) target = $region32
        $region31: #{global_graph_attention.1} parent=23 // pred_region
          %s223 = sand.u32 %s20, 1
          %s224 = scalar_lea.sflag [#allocation10], %s223
          %s225 = sand.u32 %s70, 1
          %s226 = smul.addr %s225, 16
          %s227 = scalar_lea.vmem [#allocation9], %s226
          %s228 = smul.u32 2, %s28
          %230 = vsyncadd %s224, 0
          %s231 = smul.addr %s27, 2
          %s232 = sadd.s32 %s228, %s231
          %s233 = smul.addr %s232, 8
          %s234 = scalar_lea.hbm %s1, %s233
          %s235 = sshll.u32 %s234, 4
          %s236 = int_to_ptr.hbm [resolvable:$true] %s235
          %s237 = sshll.u32 %s227, 4
          %s238 = int_to_ptr.vmem [resolvable:$true] %s237
          %243 = dma.hbm_to_vmem [thread:$0]  %s236, 256, %s238, %s224, 128, 128, 8
        $region32: #{global_graph_attention.1} parent=23 // pred_fallthru
          _
      $region24: #{global_graph_attention.1} parent=5 // pred_fallthru
        _
      %p244 = scmp.le.s32.totalorder 1, %s20
      %p245 = scmp.lt.s32.totalorder %s20, 3
      %p246 = pnand %p244, %p245
      %p247 = pneg %p246
      // Predicated region
      $region33: #{global_graph_attention.1} parent=5 // pred_check
        _
      $region34: #{global_graph_attention.1} parent=5 // pred_check_branch
        %249 = sbr.rel (%p246) target = $region36
      $region35: #{global_graph_attention.1} parent=5 // pred_region
        %s250 = ssub.s32 %s20, 1
        %s251 = sand.u32 %s45, 1
        %s252 = scalar_lea.sflag [#allocation7], %s251
        %s253 = sand.u32 %s45, 1
        %s254 = smul.addr %s253, 8
        %s255 = scalar_lea.vmem [#allocation6], %s254
        // Predicated region
        $region37: #{global_graph_attention.1} parent=35 // pred_check
          %p256 = pneg %p58
        $region38: #{global_graph_attention.1} parent=35 // pred_check_branch
          %258 = sbr.rel (%p256) target = $region40
        $region39: #{global_graph_attention.1} parent=35 // pred_region
          %260 = dma.done %s252, 128
        $region40: #{global_graph_attention.1} parent=35 // pred_fallthru
          _
        %s261 = sand.u32 %s25, 1
        %s262 = scalar_lea.sflag [#allocation10], %s261
        %s263 = sand.u32 %s73, 1
        %s264 = smul.addr %s263, 16
        %s265 = scalar_lea.vmem [#allocation9], %s264
        // Predicated region
        $region41: #{global_graph_attention.1} parent=35 // pred_check
          %p266 = pneg %p86
        $region42: #{global_graph_attention.1} parent=35 // pred_check_branch
          %268 = sbr.rel (%p266) target = $region44
        $region43: #{global_graph_attention.1} parent=35 // pred_region
          %270 = dma.done %s262, 256
        $region44: #{global_graph_attention.1} parent=35 // pred_fallthru
          _
        // Predicated region
        $region45: #{global_graph_attention.1} parent=35 // pred_check
          %p271 = pneg %p107
        $region46: #{global_graph_attention.1} parent=35 // pred_check_branch
          %273 = sbr.rel (%p271) target = $region48
        $region47: #{global_graph_attention.1} parent=35 // pred_region
          %275 = dma.done [#allocation10], 1024
        $region48: #{global_graph_attention.1} parent=35 // pred_fallthru
          _
        // Predicated region
        $region49: #{global_graph_attention.1} parent=35 // pred_check
          %p276 = pneg %p128
        $region50: #{global_graph_attention.1} parent=35 // pred_check_branch
          %278 = sbr.rel (%p276) target = $region52
        $region51: #{global_graph_attention.1} parent=35 // pred_region
          %280 = dma.done [#allocation13], 2048
        $region52: #{global_graph_attention.1} parent=35 // pred_fallthru
          _
        %s281 = sand.u32 %s45, 1
        %s282 = scalar_lea.sflag [#allocation7], %s281
        %s283 = sand.u32 %s45, 1
        %s284 = smul.addr %s283, 8
        %s285 = scalar_lea.vmem [#allocation6], %s284
        %p286 = pneg %p58
        %p287 = pneg %p55
        %s288 = sand.u32 %s25, 1
        %s289 = scalar_lea.sflag [#allocation10], %s288
        %s290 = sand.u32 %s73, 1
        %s291 = smul.addr %s290, 16
        %s292 = scalar_lea.vmem [#allocation9], %s291
        %p293 = pneg %p86
        %p294 = pneg %p83
        %p295 = pneg %p107
        %p296 = pneg %p104
        %p297 = pneg %p128
        %p298 = pneg %p125
        %p299 = pneg %p154
        %p300 = pneg %p151
        %s301 = sand.u32 %s141, 1
        %s302 = scalar_lea.sflag [#allocation8], %s301
        %s303 = sand.u32 %s141, 1
        %s304 = smul.addr %s303, 8
        %s305 = scalar_lea.vmem [#allocation14], %s304
        %s306 = smul.u32 2, %s30
        %p308 = scmp.eq.s32.totalorder %s30, 0
        // Predicated region
        $region53: #{global_graph_attention.1} parent=35 // pred_check
          %p309 = pneg %p308
        $region54: #{global_graph_attention.1} parent=35 // pred_check_branch
          %311 = sbr.rel (%p309) target = $region56
        $region55: #{global_graph_attention.1} parent=35 // pred_region
          %v312 = vld [vmem:[%s255] sm:$0xff]
          %v313 = vpack.c.bf16 %v312, %v312
          %v314 = vld [vmem:[#allocation11] sm:$0xf]
          %v315 = vld [vmem:[#allocation11 + $0x4] sm:$0xf]
          %v316 = vld [vmem:[#allocation11 + $0x8] sm:$0xf]
          %v317 = vld [vmem:[#allocation11 + $0xc] sm:$0xf]
          %v318 = vld [vmem:[#allocation11 + $0x10] sm:$0xf]
          %v319 = vld [vmem:[#allocation11 + $0x14] sm:$0xf]
          %v320 = vld [vmem:[#allocation11 + $0x18] sm:$0xf]
          %v321 = vld [vmem:[#allocation11 + $0x1c] sm:$0xf]
          %v322 = vld [vmem:[#allocation11 + $0x20] sm:$0xf]
          %v323 = vld [vmem:[#allocation11 + $0x24] sm:$0xf]
          %v324 = vld [vmem:[#allocation11 + $0x28] sm:$0xf]
          %v325 = vld [vmem:[#allocation11 + $0x2c] sm:$0xf]
          %v326 = vld [vmem:[#allocation11 + $0x30] sm:$0xf]
          %v327 = vld [vmem:[#allocation11 + $0x34] sm:$0xf]
          %v328 = vld [vmem:[#allocation11 + $0x38] sm:$0xf]
          %v329 = vld [vmem:[#allocation11 + $0x3c] sm:$0xf]
          %v346 = vunpack.c.l.b16 %v314
          %v347 = vunpack.c.l.b16 %v315
          %v348 = vunpack.c.l.b16 %v316
          %v349 = vunpack.c.l.b16 %v317
          %v350 = vunpack.c.l.b16 %v318
          %v351 = vunpack.c.l.b16 %v319
          %v352 = vunpack.c.l.b16 %v320
          %v353 = vunpack.c.l.b16 %v321
          %v354 = vunpack.c.l.b16 %v322
          %v355 = vunpack.c.l.b16 %v323
          %v356 = vunpack.c.l.b16 %v324
          %v357 = vunpack.c.l.b16 %v325
          %v358 = vunpack.c.l.b16 %v326
          %v359 = vunpack.c.l.b16 %v327
          %v360 = vunpack.c.l.b16 %v328
          %v361 = vunpack.c.l.b16 %v329
          %v362 = vpack.c.b16 %v347, %v346
          %v363 = vpack.c.b16 %v349, %v348
          %v364 = vpack.c.b16 %v351, %v350
          %v365 = vpack.c.b16 %v353, %v352
          %v366 = vpack.c.b16 %v355, %v354
          %v367 = vpack.c.b16 %v357, %v356
          %v368 = vpack.c.b16 %v359, %v358
          %v369 = vpack.c.b16 %v361, %v360
          %378 = vmatpush.bf16.msra.mxu0 %v369
          %379 = vmatpush.bf16.msra.mxu0 %v368
          %380 = vmatpush.bf16.msra.mxu0 %v367
          %381 = vmatpush.bf16.msra.mxu0 %v366
          %382 = vmatpush.bf16.msra.mxu0 %v365
          %383 = vmatpush.bf16.msra.mxu0 %v364
          %384 = vmatpush.bf16.msra.mxu0 %v363
          %385 = vmatpush.bf16.msra.mxu0 %v362
          %386 = vmatmul.bf16.gmra.mxu0 %v313
          %v387 = vpop.f32.mrf.mxu0
          %v388 = vadd.f32 0.0, %v387
          %v389 = vpop.f32.mrf.mxu0
          %390 = vdwg.mxu0
          %v391 = vpack.c.bf16 %v388, %v388
          %392 = vst [vmem:[#allocation2] sm:$0xf] %v391
          %vm393 = vcmask 7168
          %394 = vst.msk [vmem:[#allocation3] sm:$0xff] %vm393, -inf
          %395 = vst.msk [vmem:[#allocation4] sm:$0xff] %vm393, 0.0
          %396 = vst [vmem:[#allocation5] sm:$0xff] 0.0
        $region56: #{global_graph_attention.1} parent=35 // pred_fallthru
          _
        %v397 = vld [vmem:[%s265] sm:$0xff]
        %v398 = vld [vmem:[%s265 + $0x8] sm:$0xff]
        %v399 = vpack.c.bf16 %v398, %v397
        %v400 = vld [vmem:[#allocation12] sm:$0xff]
        %v401 = vld [vmem:[#allocation12 + $0x8] sm:$0xff]
        %v402 = vld [vmem:[#allocation12 + $0x10] sm:$0xff]
        %v403 = vld [vmem:[#allocation12 + $0x18] sm:$0xff]
        %v404 = vld [vmem:[#allocation12 + $0x20] sm:$0xff]
        %v405 = vld [vmem:[#allocation12 + $0x28] sm:$0xff]
        %v406 = vld [vmem:[#allocation12 + $0x30] sm:$0xff]
        %v407 = vld [vmem:[#allocation12 + $0x38] sm:$0xff]
        %v408 = vld [vmem:[#allocation12 + $0x40] sm:$0xff]
        %v409 = vld [vmem:[#allocation12 + $0x48] sm:$0xff]
        %v410 = vld [vmem:[#allocation12 + $0x50] sm:$0xff]
        %v411 = vld [vmem:[#allocation12 + $0x58] sm:$0xff]
        %v412 = vld [vmem:[#allocation12 + $0x60] sm:$0xff]
        %v413 = vld [vmem:[#allocation12 + $0x68] sm:$0xff]
        %v414 = vld [vmem:[#allocation12 + $0x70] sm:$0xff]
        %v415 = vld [vmem:[#allocation12 + $0x78] sm:$0xff]
        %v432 = vunpack.c.l.b16 %v400
        %v433 = vunpack.c.h.b16 %v400
        %v434 = vunpack.c.l.b16 %v401
        %v435 = vunpack.c.h.b16 %v401
        %v436 = vunpack.c.l.b16 %v402
        %v437 = vunpack.c.h.b16 %v402
        %v438 = vunpack.c.l.b16 %v403
        %v439 = vunpack.c.h.b16 %v403
        %v440 = vunpack.c.l.b16 %v404
        %v441 = vunpack.c.h.b16 %v404
        %v442 = vunpack.c.l.b16 %v405
        %v443 = vunpack.c.h.b16 %v405
        %v444 = vunpack.c.l.b16 %v406
        %v445 = vunpack.c.h.b16 %v406
        %v446 = vunpack.c.l.b16 %v407
        %v447 = vunpack.c.h.b16 %v407
        %v448 = vunpack.c.l.b16 %v408
        %v449 = vunpack.c.h.b16 %v408
        %v450 = vunpack.c.l.b16 %v409
        %v451 = vunpack.c.h.b16 %v409
        %v452 = vunpack.c.l.b16 %v410
        %v453 = vunpack.c.h.b16 %v410
        %v454 = vunpack.c.l.b16 %v411
        %v455 = vunpack.c.h.b16 %v411
        %v456 = vunpack.c.l.b16 %v412
        %v457 = vunpack.c.h.b16 %v412
        %v458 = vunpack.c.l.b16 %v413
        %v459 = vunpack.c.h.b16 %v413
        %v460 = vunpack.c.l.b16 %v414
        %v461 = vunpack.c.h.b16 %v414
        %v462 = vunpack.c.l.b16 %v415
        %v463 = vunpack.c.h.b16 %v415
        %v464 = vpack.c.b16 %v434, %v432
        %v465 = vpack.c.b16 %v435, %v433
        %v466 = vpack.c.b16 %v438, %v436
        %v467 = vpack.c.b16 %v439, %v437
        %v468 = vpack.c.b16 %v442, %v440
        %v469 = vpack.c.b16 %v443, %v441
        %v470 = vpack.c.b16 %v446, %v444
        %v471 = vpack.c.b16 %v447, %v445
        %v472 = vpack.c.b16 %v450, %v448
        %v473 = vpack.c.b16 %v451, %v449
        %v474 = vpack.c.b16 %v454, %v452
        %v475 = vpack.c.b16 %v455, %v453
        %v476 = vpack.c.b16 %v458, %v456
        %v477 = vpack.c.b16 %v459, %v457
        %v478 = vpack.c.b16 %v462, %v460
        %v479 = vpack.c.b16 %v463, %v461
        %496 = vmatpush.bf16.msra.mxu0 %v478
        %497 = vmatpush.bf16.msra.mxu0 %v476
        %498 = vmatpush.bf16.msra.mxu0 %v474
        %499 = vmatpush.bf16.msra.mxu0 %v472
        %500 = vmatpush.bf16.msra.mxu0 %v470
        %501 = vmatpush.bf16.msra.mxu0 %v468
        %502 = vmatpush.bf16.msra.mxu0 %v466
        %503 = vmatpush.bf16.msra.mxu0 %v464
        %504 = vmatmul.bf16.gmra.mxu0 %v399
        %v505 = vpop.f32.mrf.mxu0
        %v506 = vadd.f32 0.0, %v505
        %v507 = vpop.f32.mrf.mxu0
        %v508 = vadd.f32 0.0, %v507
        %509 = vdwg.mxu0
        %510 = vmatpush.bf16.msra.mxu0 %v479
        %511 = vmatpush.bf16.msra.mxu0 %v477
        %512 = vmatpush.bf16.msra.mxu0 %v475
        %513 = vmatpush.bf16.msra.mxu0 %v473
        %514 = vmatpush.bf16.msra.mxu0 %v471
        %515 = vmatpush.bf16.msra.mxu0 %v469
        %516 = vmatpush.bf16.msra.mxu0 %v467
        %517 = vmatpush.bf16.msra.mxu0 %v465
        %518 = vmatmul.bf16.gmra.mxu0 %v399
        %v519 = vpop.f32.mrf.mxu0
        %v520 = vadd.f32 0.0, %v519
        %v521 = vpop.f32.mrf.mxu0
        %v522 = vadd.f32 0.0, %v521
        %523 = vdwg.mxu0
        %v524 = vpack.c.bf16 %v520, %v506
        %v525 = vpack.c.bf16 %v522, %v508
        %v526 = vld [vmem:[#allocation2] sm:$0xf]
        %v529 = vunpack.c.l.b16 %v524
        %v530 = vunpack.c.l.b16 %v525
        %v531 = vpack.c.b16 %v530, %v529
        %533 = vmatpush.bf16.xpose.msra.mxu0 0
        %534 = vmatpush.bf16.xpose.msra.mxu0 0
        %535 = vmatpush.bf16.xpose.msra.mxu0 0
        %536 = vmatpush.bf16.xpose.msra.mxu0 0
        %537 = vmatpush.bf16.xpose.msra.mxu0 0
        %538 = vmatpush.bf16.xpose.msra.mxu0 0
        %539 = vmatpush.bf16.xpose.msra.mxu0 0
        %540 = vmatpush.bf16.xpose.msra.mxu0 %v531
        %541 = vmatmul.bf16.gmra.mxu0 %v526
        %v542 = vpop.f32.mrf.mxu0
        %v543 = vadd.f32 0.0, %v542
        %v544 = vpop.f32.mrf.mxu0
        %545 = vdwg.mxu0
        %v546 = vld [vmem:[#allocation3] sm:$0xff]
        %vm547 = vcmask 130048
        %v548 = vsel %vm547, %v543, -inf
        %549 = vmax.xlane.f32.xlu0 %v548
        %v550 = vpop.xlane.xlu0 %549
        %v551 = vmax.f32 %v546, %v550
        %v552 = vsub.f32 %v546, %v551
        %v553 = vmul.f32 %v552, 1.442695
        %v554 = vpow.pop %v553
        %556 = vset.pattern.permute.xlu0 0
        %557 = vperm.xlu0 %556, %v551
        %v558 = vpop.permute.xlu0 %557
        %v560 = vsub.f32 %v543, %v558
        %v561 = vmul.f32 %v560, 1.442695
        %v562 = vpow.pop %v561
        %v563 = vld [vmem:[#allocation4] sm:$0xff]
        %v564 = vmul.f32 %v554, %v563
        %v565 = vsel %vm547, %v562, 0.0
        %566 = vadd.xlane.f32.xlu0 %v565
        %v567 = vpop.xlane.xlu0 %566
        %v568 = vadd.f32 %v564, %v567
        %vm569 = vcmask 7168
        %570 = vst.msk [vmem:[#allocation4] sm:$0xff] %vm569, %v568
        %v571 = vld [vmem:[#allocation5] sm:$0xff]
        %573 = vset.pattern.permute.xlu0 0
        %574 = vperm.xlu0 %573, %v554
        %v575 = vpop.permute.xlu0 %574
        %v577 = vmul.f32 %v575, %v571
        %v578 = vpack.c.bf16 %v562, %v562
        %v579 = vrot.slane %v524, 4
        %v580 = vrot.slane %v525, 4
        %v581 = vunpack.c.l.b16 %v579
        %v582 = vunpack.c.l.b16 %v580
        %v583 = vpack.c.b16 %v582, %v581
        %v586 = vsel %vm547, %v578, 0
        %588 = vmatpush.bf16.msra.mxu0 0
        %589 = vmatpush.bf16.msra.mxu0 0
        %590 = vmatpush.bf16.msra.mxu0 0
        %591 = vmatpush.bf16.msra.mxu0 0
        %592 = vmatpush.bf16.msra.mxu0 0
        %593 = vmatpush.bf16.msra.mxu0 0
        %594 = vmatpush.bf16.msra.mxu0 0
        %595 = vmatpush.bf16.msra.mxu0 %v583
        %596 = vmatmul.bf16.gmra.mxu0 %v586
        %v597 = vpop.f32.mrf.mxu0
        %v598 = vadd.f32 0.0, %v597
        %v599 = vpop.f32.mrf.mxu0
        %600 = vdwg.mxu0
        %v601 = vadd.f32 %v577, %v598
        %602 = vst [vmem:[#allocation5] sm:$0xff] %v601
        %603 = vst.msk [vmem:[#allocation3] sm:$0xff] %vm569, %v551
        // Predicated region
        $region57: #{global_graph_attention.1} parent=35 // pred_check
          %p604 = pneg %p308
        $region58: #{global_graph_attention.1} parent=35 // pred_check_branch
          %606 = sbr.rel (%p604) target = $region60
        $region59: #{global_graph_attention.1} parent=35 // pred_region
          %v607 = vld [vmem:[#allocation4] sm:$0xff]
          %v608 = vrcp.pop %v607
          %v609 = vld [vmem:[#allocation5] sm:$0xff]
          %611 = vset.pattern.permute.xlu0 0
          %612 = vperm.xlu0 %611, %v608
          %v613 = vpop.permute.xlu0 %612
          %v615 = vmul.f32 %v609, %v613
          %616 = vst [vmem:[%s305] sm:$0xff] %v615
        $region60: #{global_graph_attention.1} parent=35 // pred_fallthru
          _
        %s617 = sand.u32 %s141, 1
        %s618 = scalar_lea.sflag [#allocation8], %s617
        %s619 = sand.u32 %s141, 1
        %s620 = smul.addr %s619, 8
        %s621 = scalar_lea.vmem [#allocation14], %s620
        // Predicated region
        $region61: #{global_graph_attention.1} parent=35 // pred_check
          %p622 = pneg %p151
        $region62: #{global_graph_attention.1} parent=35 // pred_check_branch
          %624 = sbr.rel (%p622) target = $region64
        $region63: #{global_graph_attention.1} parent=35 // pred_region
          %626 = vsyncadd %s618, 0
          %s627 = smul.addr %s29, 8
          %s628 = scalar_lea.hbm %s4, %s627
          %s630 = sshll.u32 %s621, 4
          %s631 = int_to_ptr.vmem [resolvable:$true] %s630
          %s632 = sshll.u32 %s628, 4
          %s633 = int_to_ptr.hbm [resolvable:$true] %s632
          %635 = dma.vmem_to_hbm [thread:$0]  %s631, 128, %s633, %s618
        $region64: #{global_graph_attention.1} parent=35 // pred_fallthru
          _
      $region36: #{global_graph_attention.1} parent=5 // pred_fallthru
        _
      %p636 = scmp.le.s32.totalorder 2, %s20
      // Predicated region
      $region65: #{global_graph_attention.1} parent=5 // pred_check
        %p637 = pneg %p636
      $region66: #{global_graph_attention.1} parent=5 // pred_check_branch
        %639 = sbr.rel (%p637) target = $region68
      $region67: #{global_graph_attention.1} parent=5 // pred_region
        %s640 = ssub.s32 %s20, 2
        // Predicated region
        $region69: #{global_graph_attention.1} parent=67 // pred_check
          %p641 = pneg %p157
        $region70: #{global_graph_attention.1} parent=67 // pred_check_branch
          %643 = sbr.rel (%p641) target = $region72
        $region71: #{global_graph_attention.1} parent=67 // pred_region
          %s644 = sand.u32 %s142, 1
          %s645 = scalar_lea.sflag [#allocation8], %s644
          %s646 = sand.u32 %s142, 1
          %s647 = smul.addr %s646, 8
          %s648 = scalar_lea.vmem [#allocation14], %s647
          %650 = dma.done %s645, 128
        $region72: #{global_graph_attention.1} parent=67 // pred_fallthru
          _
      $region68: #{global_graph_attention.1} parent=5 // pred_fallthru
        _
    $region6: #{global_graph_attention.1} parent=1 // loop_footer
      %s24 = sadd.s32 1, %s20
    $region7: #{global_graph_attention.1} parent=1 // loop_footer_branch
      %19 = sbr.rel target = $region3
    $region8: #{global_graph_attention.1} parent=1 // loop_exit
      _
    %651 = vsyncpa [#allocation7], 1
    %s652 = scalar_lea.sflag [#allocation7], 1
    %653 = vsyncpa %s652, 1
    %654 = vsyncpa [#allocation10], 1
    %s655 = scalar_lea.sflag [#allocation10], 1
    %656 = vsyncpa %s655, 1
    %657 = vsyncpa [#allocation13], 1
    %658 = vsyncpa [#allocation8], 1
    %s659 = scalar_lea.sflag [#allocation8], 1
    %660 = vsyncpa %s659, 1

</llo_original>
